<compile_context>
chip_gen: v6e
topology: v6e:2x2x1
jax: 0.10.0
libtpu: 0.0.40
codegen_flags: <defaults>
</compile_context>

<pallas_src>
import jax
import jax.numpy as jnp
from jax.experimental import pallas as pl
from jax.experimental.pallas import tpu as pltpu

EDIM = 64                  # entity embedding dim
RDIM = 64                  # relation embedding dim (must equal EDIM for the fused call)
DIM = EDIM
LEVEL_SIZES = (3, 4)       # scope granularity sizes -> self.size[l]
PHASE_IDX = 1              # forward returns at this granularity level ("phase")
SZ0 = LEVEL_SIZES[0]       # pre-phase (time-filtered) level size
SZ1 = LEVEL_SIZES[PHASE_IDX]
NUM_ENTITIES = 16
NUM_RELATIONS = 8
TILE_M = 8                 # row tile (sublane aligned)

assert EDIM == RDIM
# TODO(synk): kernel is specialized to one filtered level followed by the phase level
# (LEVEL_SIZES=(3,4), PHASE_IDX=1); deeper scopes need the index composition repeated
# once per extra pre-phase level.
assert len(LEVEL_SIZES) == 2 and PHASE_IDX == 1


# ------------------------------ Pallas kernel --------------------------------

def _tkge_fused_kernel(wsel_ref, x_ref, blk_ref, w0_ref, w1_ref, o_ref):
    """Fused: level-0 linear (block-selected via time filter) -> phase linear."""
    del wsel_ref  # only used by the index_maps (entity vs relation weight set)

    x = x_ref[...].astype(jnp.bfloat16)        # (TILE_M, DIM) gathered source rows
    blk = blk_ref[...]                         # (TILE_M, SZ0) f32 one-hot block select

    # Level 0 (non-phase): only the time-filtered slice survives, so compute the SZ0
    # candidate (DIM x DIM) blocks for the already-gathered rows and combine with the
    # per-row one-hot (VPU select) -- nothing else is materialized.
    x1 = jnp.zeros((TILE_M, DIM), jnp.float32)
    for blk_i in range(SZ0):                   # static unroll (SZ0 = 3)
        w0b = w0_ref[0, blk_i].astype(jnp.bfloat16)            # (DIM, DIM), (K, N) slab
        y0b = jax.lax.dot_general(x, w0b, (((1,), (0,)), ((), ())),
                                  preferred_element_type=jnp.float32)
        x1 = x1 + blk[:, blk_i:blk_i + 1] * y0b

    # Phase level: plain linear, lane-dense (SZ1*DIM = 256) output store.
    w1 = w1_ref[0].astype(jnp.bfloat16)                        # (DIM, SZ1*DIM)
    o_ref[...] = jax.lax.dot_general(x1.astype(jnp.bfloat16), w1,
                                     (((1,), (0,)), ((), ())),
                                     preferred_element_type=jnp.float32
                                     ).astype(o_ref.dtype)


def _round_up(n, m):
    return ((n + m - 1) // m) * m


def _pad_rows(a, rows_padded):
    r = a.shape[0]
    if rows_padded == r:
        return a
    pad = jnp.zeros((rows_padded - r,) + a.shape[1:], a.dtype)
    return jnp.concatenate([a, pad], axis=0)


def _fused_levels_pallas(x_ent, blk_ent, x_rel, blk_rel, w0_stack, w1_stack):
    """Single Pallas launch covering every row of the forward.

    x_ent : (Me, DIM) gathered entity rows,  blk_ent : (Me,) surviving level-0 block
    x_rel : (Mr, DIM) gathered relation rows, blk_rel : (Mr,)
    w0_stack : (2, SZ0, DIM, DIM) pre-transposed level-0 blocks  [entity, relation]
    w1_stack : (2, DIM, SZ1*DIM)  pre-transposed phase weights   [entity, relation]
    Returns (out_ent (Me, SZ1*DIM), out_rel (Mr, SZ1*DIM)) in float32.
    """
    Me, Mr = x_ent.shape[0], x_rel.shape[0]
    Mep, Mrp = _round_up(Me, TILE_M), _round_up(Mr, TILE_M)

    x = jnp.concatenate([_pad_rows(x_ent, Mep), _pad_rows(x_rel, Mrp)], axis=0)
    blk_idx = jnp.concatenate([_pad_rows(blk_ent, Mep), _pad_rows(blk_rel, Mrp)], axis=0)
    blk = jax.nn.one_hot(blk_idx, SZ0, dtype=jnp.float32)          # (Mp, SZ0)

    n_ent_tiles = Mep // TILE_M
    n_tiles = (Mep + Mrp) // TILE_M
    # per-tile weight-set id: 0 -> e_layers, 1 -> r_layers  (scalar prefetch, SMEM)
    wsel = jnp.concatenate([jnp.zeros((n_ent_tiles,), jnp.int32),
                            jnp.ones((n_tiles - n_ent_tiles,), jnp.int32)])

    grid_spec = pltpu.PrefetchScalarGridSpec(
        num_scalar_prefetch=1,
        grid=(n_tiles,),
        in_specs=[
            pl.BlockSpec((TILE_M, DIM), lambda i, ws: (i, 0)),
            pl.BlockSpec((TILE_M, SZ0), lambda i, ws: (i, 0)),
            pl.BlockSpec((1, SZ0, DIM, DIM), lambda i, ws: (ws[i], 0, 0, 0)),
            pl.BlockSpec((1, DIM, SZ1 * DIM), lambda i, ws: (ws[i], 0, 0)),
        ],
        out_specs=pl.BlockSpec((TILE_M, SZ1 * DIM), lambda i, ws: (i, 0)),
    )

    out = pl.pallas_call(
        _tkge_fused_kernel,
        out_shape=jax.ShapeDtypeStruct((Mep + Mrp, SZ1 * DIM), jnp.float32),
        grid_spec=grid_spec,
        compiler_params=pltpu.CompilerParams(
            dimension_semantics=("parallel",)),   # row tiles are independent (v7x: 2 TCs)
    )(wsel, x, blk, w0_stack, w1_stack)

    return out[:Me], out[Mep:Mep + Mr]


# ---------------------- TKGEModel forward (JAX wrapper) ----------------------

def _gather_indices(ids2d, filt0, sz0):
    """For one tensor group with n columns per batch row, return per output row the
    (source embedding id, surviving level-0 weight block) implied by the torch
    result.view(B, sz, -1).gather(dim=1, ...).view(B, -1, dim) time filter."""
    B, n = ids2d.shape
    k = filt0[:, None] * n + jnp.arange(n, dtype=jnp.int32)[None, :]   # (B, n)
    i = k // sz0                      # which source column of this group survives
    j = k % sz0                       # which level-0 weight block is applied
    src = jnp.take_along_axis(ids2d, i, axis=1)
    return src.reshape(-1), j.reshape(-1).astype(jnp.int32)            # (b-major, m-minor)


def tkge_forward(params, spo, time, nh, nt):
    """TKGEModel.forward(xy=(spo, time, nh, nt), phase=LEVEL_SIZES[PHASE_IDX],
    entities_only=False)."""
    ent = params["entity_embedding"]
    rel = params["relation_embedding"]
    w0_stack = params["w0_stack"]
    w1_stack = params["w1_stack"]
    B = spo.shape[0]

    # time_filter: index of the single active column of the level-0 slice.
    filt0 = jnp.argmax(time[:, 0:SZ0] != 0, axis=1).astype(jnp.int32)  # (B,)

    # Entity-path groups (all share e_layers): s, o, and optional nh / nt negatives.
    groups = [("s", spo[:, 0:1]), ("o", spo[:, 2:3])]
    if nh is not None and nh.shape[1] > 0:
        groups.append(("h", nh))
    if nt is not None and nt.shape[1] > 0:
        groups.append(("t", nt))

    ent_ids, ent_blk, group_n = [], [], []
    for _, ids in groups:
        src, blkj = _gather_indices(ids, filt0, SZ0)
        ent_ids.append(src)
        ent_blk.append(blkj)
        group_n.append(ids.shape[1])
    x_ent = ent[jnp.concatenate(ent_ids)]            # one fused embedding gather
    blk_ent = jnp.concatenate(ent_blk)

    # Relation path (entities_only=False).
    # TODO(synk): entities_only=True branch (p.unsqueeze(1).repeat(...)) not implemented.
    p_src, p_blk = _gather_indices(spo[:, 1:2], filt0, SZ0)
    x_rel = rel[p_src]

    out_ent, out_rel = _fused_levels_pallas(x_ent, blk_ent, x_rel, p_blk,
                                            w0_stack, w1_stack)

    # Split rows back per group and apply the phase-level .view(batch, sz, -1, dim).
    outs = {}
    off = 0
    for (name, _), n in zip(groups, group_n):
        rows = out_ent[off:off + B * n]              # (B*n, SZ1*DIM), b-major / m-minor
        outs[name] = rows.reshape(B, SZ1, n, DIM)    # == torch view(B, sz, -1, dim)
        off += B * n

    s = outs["s"]
    o = outs["o"]
    h = outs.get("h")
    t = outs.get("t")
    p = out_rel.reshape(B, SZ1, 1, DIM)
    return s, p, o, h, t


# ------------------- pure-JAX float32 reference (torch glue) -----------------

def _ref_linear(x, w):
    return jnp.einsum("...k,nk->...n", x, w)


def _ref_forward_levels(x, layers, time, dim):
    """Faithful float32 replica of TKGEModel._forward (torch view/gather semantics)."""
    B = x.shape[0]
    result = x
    offset = 0
    for li, sz in enumerate(LEVEL_SIZES):
        y = _ref_linear(result, layers[li])
        if li == PHASE_IDX:
            return y.reshape(B, sz, -1, dim)                          # view(B, sz, -1, dim)
        y = y.reshape(B, sz, -1)                                      # view(B, sz, -1)
        filt = jnp.argmax(time[:, offset:offset + sz] != 0, axis=1)
        y = y[jnp.arange(B), filt][:, None, :]                        # gather(dim=1, ...)
        result = y.reshape(B, -1, dim)                                # view(B, -1, dim)
        offset += sz
    return result


def ref_forward(params, spo, time, nh, nt):
    ent = params["entity_embedding"]
    rel = params["relation_embedding"]
    e_layers = params["e_layers"]
    r_layers = params["r_layers"]
    B = spo.shape[0]
    s = _ref_forward_levels(ent[spo[:, 0]], e_layers, time, EDIM)
    o = _ref_forward_levels(ent[spo[:, 2]], e_layers, time, EDIM)
    p = _ref_forward_levels(rel[spo[:, 1]], r_layers, time, RDIM)
    h = t = None
    if nh is not None and nh.shape[1] > 0:
        hh = ent[nh.reshape(-1)].reshape(B, nh.shape[1], -1)
        h = _ref_forward_levels(hh, e_layers, time, EDIM)
        h = h.reshape(s.shape[0], s.shape[1], -1, s.shape[3])
    if nt is not None and nt.shape[1] > 0:
        tt = ent[nt.reshape(-1)].reshape(B, nt.shape[1], -1)
        t = _ref_forward_levels(tt, e_layers, time, EDIM)
        t = t.reshape(s.shape[0], s.shape[1], -1, s.shape[3])
    return s, p, o, h, t


# ------------------------------ Param init ------------------------------------

def init_params(key):
    k1, k2, k3, k4 = jax.random.split(key, 4)
    embedding_range = 0.1
    entity_embedding = jax.random.uniform(
        k1, (NUM_ENTITIES, EDIM), jnp.float32, -embedding_range, embedding_range)
    relation_embedding = jax.random.uniform(
        k2, (NUM_RELATIONS, RDIM), jnp.float32, -embedding_range, embedding_range)

    e_layers, r_layers = [], []
    ek = jax.random.split(k3, len(LEVEL_SIZES))
    rk = jax.random.split(k4, len(LEVEL_SIZES))
    for li, sz in enumerate(LEVEL_SIZES):
        # __init__: torch.ones(sz, dim).diag_embed(dim1=1).view(-1, dim) == sz stacked
        # identity matrices; add a perturbation so the matmuls and the time-filter
        # block selection are nontrivial (pure identity would hide indexing bugs).
        eye_e = jnp.tile(jnp.eye(EDIM, dtype=jnp.float32), (sz, 1))        # (sz*edim, edim)
        eye_r = jnp.tile(jnp.eye(RDIM, dtype=jnp.float32), (sz, 1))
        e_layers.append(eye_e + 0.1 * jax.random.normal(ek[li], eye_e.shape, jnp.float32))
        r_layers.append(eye_r + 0.1 * jax.random.normal(rk[li], eye_r.shape, jnp.float32))

    # Pre-pack / pre-transpose the linear weights ONCE (perf feedback: no in-kernel
    # XLU transpose, no per-call reshuffling):
    #   level 0 : (sz0*dim, dim) -> (sz0, K, N) per-block right-multiply slabs
    #   phase   : (sz1*dim, dim) -> (K, sz1*dim) lane-dense right-multiply slab
    def pack(layers):
        w0 = layers[0].reshape(SZ0, DIM, DIM).transpose(0, 2, 1)           # (SZ0, K, N)
        w1 = layers[PHASE_IDX].T                                           # (K, SZ1*DIM)
        return w0, w1

    w0_e, w1_e = pack(e_layers)
    w0_r, w1_r = pack(r_layers)

    return dict(entity_embedding=entity_embedding,
                relation_embedding=relation_embedding,
                e_layers=e_layers, r_layers=r_layers,
                w0_stack=jnp.stack([w0_e, w0_r]),        # (2, SZ0, DIM, DIM)
                w1_stack=jnp.stack([w1_e, w1_r]),        # (2, DIM, SZ1*DIM)
                gamma=jnp.float32(12.0),                 # unused by forward()
                modulus=jnp.float32(1.0),                # unused by forward()
                embedding_range=jnp.float32(embedding_range))  # unused by forward()


# --------------------------------- Main ---------------------------------------

if __name__ == "__main__":
    key = jax.random.PRNGKey(0)
    pkey, dkey = jax.random.split(key)
    params = init_params(pkey)

    B, NHS, NTS = 2, 3, 3
    k_spo, k_t, k_nh, k_nt = jax.random.split(dkey, 4)
    spo = jnp.stack([
        jax.random.randint(k_spo, (B,), 0, NUM_ENTITIES),
        jax.random.randint(jax.random.fold_in(k_spo, 1), (B,), 0, NUM_RELATIONS),
        jax.random.randint(jax.random.fold_in(k_spo, 2), (B,), 0, NUM_ENTITIES),
    ], axis=1).astype(jnp.int32)

    # time indicator: exactly one active column per granularity slice per batch row
    tks = jax.random.split(k_t, len(LEVEL_SIZES))
    time_cols = []
    for li, sz in enumerate(LEVEL_SIZES):
        idx = jax.random.randint(tks[li], (B,), 0, sz)
        time_cols.append(jax.nn.one_hot(idx, sz, dtype=jnp.float32))
    time = jnp.concatenate(time_cols, axis=1)            # (B, sum(LEVEL_SIZES))

    nh = jax.random.randint(k_nh, (B, NHS), 0, NUM_ENTITIES).astype(jnp.int32)
    nt = jax.random.randint(k_nt, (B, NTS), 0, NUM_ENTITIES).astype(jnp.int32)

    fwd = jax.jit(tkge_forward)
    s, p, o, h, t = jax.block_until_ready(fwd(params, spo, time, nh, nt))

    # faithful float32 reference of the original torch forward
    s_r, p_r, o_r, h_r, t_r = ref_forward(params, spo, time, nh, nt)

    assert s.shape == (B, SZ1, 1, EDIM)
    assert p.shape == (B, SZ1, 1, RDIM)
    assert o.shape == (B, SZ1, 1, EDIM)
    assert h.shape == (B, SZ1, NHS, EDIM)
    assert t.shape == (B, SZ1, NTS, EDIM)
    # Kernel uses bf16 MXU inputs with f32 accumulation; 1e-2 comfortably bounds the
    # bf16 rounding (~1e-3 here) while any indexing/gather bug would show errors >=5e-2.
    for a, b in ((s, s_r), (p, p_r), (o, o_r), (h, h_r), (t, t_r)):
        assert a.shape == b.shape
        err = float(jnp.max(jnp.abs(a - b)))
        assert jnp.allclose(a, b, atol=1e-2, rtol=1e-2), err

    print("KERNEL_OK")
</pallas_src>

<mosaic_0001>
module attributes {stable_mosaic.version = 11 : i64} {
  func.func @_tkge_fused_kernel(%arg0: i32, %arg1: memref<3xi32, #tpu.memory_space<smem>>, %arg2: memref<8x64xf32, #tpu.memory_space<vmem>>, %arg3: memref<8x3xf32, #tpu.memory_space<vmem>>, %arg4: memref<1x3x64x64xf32, #tpu.memory_space<vmem>>, %arg5: memref<1x64x256xf32, #tpu.memory_space<vmem>>, %arg6: memref<8x256xf32, #tpu.memory_space<vmem>>) attributes {dimension_semantics = [#tpu.dimension_semantics<parallel>], iteration_bounds = array<i64: 3>, scalar_prefetch = 1 : i64, scratch_operands = 0 : i64, tpu.core_type = #tpu.core_type<tc>, window_params = [{transform_indices = @transform_0, window_bounds = array<i64: 8, 64>}, {transform_indices = @transform_1, window_bounds = array<i64: 8, 3>}, {transform_indices = @transform_2, window_bounds = array<i64: 1, 3, 64, 64>}, {transform_indices = @transform_3, window_bounds = array<i64: 1, 64, 256>}, {transform_indices = @transform_4, window_bounds = array<i64: 8, 256>}]} {
    %c0 = arith.constant 0 : index
    %c0_0 = arith.constant 0 : index
    %0 = vector.load %arg2[%c0, %c0_0] : memref<8x64xf32, #tpu.memory_space<vmem>>, vector<8x64xf32>
    %1 = arith.truncf %0 : vector<8x64xf32> to vector<8x64xbf16>
    %c0_1 = arith.constant 0 : index
    %c0_2 = arith.constant 0 : index
    %2 = vector.load %arg3[%c0_1, %c0_2] : memref<8x3xf32, #tpu.memory_space<vmem>>, vector<8x3xf32>
    %cst = arith.constant 0.000000e+00 : f32
    %3 = vector.broadcast %cst : f32 to vector<8x64xf32>
    %c0_3 = arith.constant 0 : index
    %c0_4 = arith.constant 0 : index
    %c0_5 = arith.constant 0 : index
    %c0_6 = arith.constant 0 : index
    %4 = vector.load %arg4[%c0_3, %c0_4, %c0_5, %c0_6] : memref<1x3x64x64xf32, #tpu.memory_space<vmem>>, vector<1x1x64x64xf32>
    %5 = vector.shape_cast %4 : vector<1x1x64x64xf32> to vector<64x64xf32>
    %6 = arith.truncf %5 : vector<64x64xf32> to vector<64x64xbf16>
    %cst_7 = arith.constant dense<0.000000e+00> : vector<8x64xf32>
    %7 = tpu.matmul %1, %6, %cst_7 {dimension_numbers = #tpu.dot_dimension_numbers<[1], [0], [0], [1], [0, 0, 1, 1], [], []>} : vector<8x64xbf16>, vector<64x64xbf16>, vector<8x64xf32> -> vector<8x64xf32>
    %8 = vector.extract_strided_slice %2 {offsets = [0, 0], sizes = [8, 1], strides = [1, 1]} : vector<8x3xf32> to vector<8x1xf32>
    %9 = vector.broadcast %8 : vector<8x1xf32> to vector<8x64xf32>
    %10 = arith.mulf %9, %7 : vector<8x64xf32>
    %11 = arith.addf %3, %10 : vector<8x64xf32>
    %c0_8 = arith.constant 0 : index
    %c1 = arith.constant 1 : index
    %c0_9 = arith.constant 0 : index
    %c0_10 = arith.constant 0 : index
    %12 = vector.load %arg4[%c0_8, %c1, %c0_9, %c0_10] : memref<1x3x64x64xf32, #tpu.memory_space<vmem>>, vector<1x1x64x64xf32>
    %13 = vector.shape_cast %12 : vector<1x1x64x64xf32> to vector<64x64xf32>
    %14 = arith.truncf %13 : vector<64x64xf32> to vector<64x64xbf16>
    %cst_11 = arith.constant dense<0.000000e+00> : vector<8x64xf32>
    %15 = tpu.matmul %1, %14, %cst_11 {dimension_numbers = #tpu.dot_dimension_numbers<[1], [0], [0], [1], [0, 0, 1, 1], [], []>} : vector<8x64xbf16>, vector<64x64xbf16>, vector<8x64xf32> -> vector<8x64xf32>
    %16 = vector.extract_strided_slice %2 {offsets = [0, 1], sizes = [8, 1], strides = [1, 1]} : vector<8x3xf32> to vector<8x1xf32>
    %17 = vector.broadcast %16 : vector<8x1xf32> to vector<8x64xf32>
    %18 = arith.mulf %17, %15 : vector<8x64xf32>
    %19 = arith.addf %11, %18 : vector<8x64xf32>
    %c0_12 = arith.constant 0 : index
    %c2 = arith.constant 2 : index
    %c0_13 = arith.constant 0 : index
    %c0_14 = arith.constant 0 : index
    %20 = vector.load %arg4[%c0_12, %c2, %c0_13, %c0_14] : memref<1x3x64x64xf32, #tpu.memory_space<vmem>>, vector<1x1x64x64xf32>
    %21 = vector.shape_cast %20 : vector<1x1x64x64xf32> to vector<64x64xf32>
    %22 = arith.truncf %21 : vector<64x64xf32> to vector<64x64xbf16>
    %cst_15 = arith.constant dense<0.000000e+00> : vector<8x64xf32>
    %23 = tpu.matmul %1, %22, %cst_15 {dimension_numbers = #tpu.dot_dimension_numbers<[1], [0], [0], [1], [0, 0, 1, 1], [], []>} : vector<8x64xbf16>, vector<64x64xbf16>, vector<8x64xf32> -> vector<8x64xf32>
    %24 = vector.extract_strided_slice %2 {offsets = [0, 2], sizes = [8, 1], strides = [1, 1]} : vector<8x3xf32> to vector<8x1xf32>
    %25 = vector.broadcast %24 : vector<8x1xf32> to vector<8x64xf32>
    %26 = arith.mulf %25, %23 : vector<8x64xf32>
    %27 = arith.addf %19, %26 : vector<8x64xf32>
    %c0_16 = arith.constant 0 : index
    %c0_17 = arith.constant 0 : index
    %c0_18 = arith.constant 0 : index
    %28 = vector.load %arg5[%c0_16, %c0_17, %c0_18] : memref<1x64x256xf32, #tpu.memory_space<vmem>>, vector<1x64x256xf32>
    %29 = vector.shape_cast %28 : vector<1x64x256xf32> to vector<64x256xf32>
    %30 = arith.truncf %29 : vector<64x256xf32> to vector<64x256xbf16>
    %31 = arith.truncf %27 : vector<8x64xf32> to vector<8x64xbf16>
    %cst_19 = arith.constant dense<0.000000e+00> : vector<8x256xf32>
    %32 = tpu.matmul %31, %30, %cst_19 {dimension_numbers = #tpu.dot_dimension_numbers<[1], [0], [0], [1], [0, 0, 1, 1], [], []>} : vector<8x64xbf16>, vector<64x256xbf16>, vector<8x256xf32> -> vector<8x256xf32>
    %c0_20 = arith.constant 0 : index
    %c0_21 = arith.constant 0 : index
    %33 = vector.load %arg6[%c0_20, %c0_21] : memref<8x256xf32, #tpu.memory_space<vmem>>, vector<8x256xf32>
    tpu.vector_store %arg6[%c0_20, %c0_21], %32 {strides = array<i32>} : memref<8x256xf32, #tpu.memory_space<vmem>>, vector<8x256xf32>,
    return
  }
  func.func @transform_0(%arg0: i32, %arg1: memref<3xi32, #tpu.memory_space<smem>>) -> (i32, i32) {
    %c0_i32 = arith.constant 0 : i32
    %c0_i32_0 = arith.constant 0 : i32
    return %arg0, %c0_i32 : i32, i32
  }
  func.func @transform_1(%arg0: i32, %arg1: memref<3xi32, #tpu.memory_space<smem>>) -> (i32, i32) {
    %c0_i32 = arith.constant 0 : i32
    %c0_i32_0 = arith.constant 0 : i32
    return %arg0, %c0_i32 : i32, i32
  }
  func.func @transform_2(%arg0: i32, %arg1: memref<3xi32, #tpu.memory_space<smem>>) -> (i32, i32, i32, i32) {
    %0 = arith.index_cast %arg0 : i32 to index
    %1 = memref.load %arg1[%0] : memref<3xi32, #tpu.memory_space<smem>>
    %c0_i32 = arith.constant 0 : i32
    %c0_i32_0 = arith.constant 0 : i32
    %c0_i32_1 = arith.constant 0 : i32
    %c0_i32_2 = arith.constant 0 : i32
    return %1, %c0_i32, %c0_i32_0, %c0_i32_1 : i32, i32, i32, i32
  }
  func.func @transform_3(%arg0: i32, %arg1: memref<3xi32, #tpu.memory_space<smem>>) -> (i32, i32, i32) {
    %0 = arith.index_cast %arg0 : i32 to index
    %1 = memref.load %arg1[%0] : memref<3xi32, #tpu.memory_space<smem>>
    %c0_i32 = arith.constant 0 : i32
    %c0_i32_0 = arith.constant 0 : i32
    %c0_i32_1 = arith.constant 0 : i32
    return %1, %c0_i32, %c0_i32_0 : i32, i32, i32
  }
  func.func @transform_4(%arg0: i32, %arg1: memref<3xi32, #tpu.memory_space<smem>>) -> (i32, i32) {
    %c0_i32 = arith.constant 0 : i32
    %c0_i32_0 = arith.constant 0 : i32
    return %arg0, %c0_i32 : i32, i32
  }
}

</mosaic_0001>

<llo_original>
// kernel: tkge_forward.1
$region0: #{tkge_forward.1}
  #allocation0 [shape = 'u32[]', space=smem, size = 0x4, offset = 0x4, fixed_abs, tag = 'smem constant byte address 0x4 - core index']
  #allocation1 [shape = 'u32[144,128]{1,0:T(1,128)}', space=vmem, size = 0x12000, scoped, tag = 'internal scratch']
  #allocation2 [shape = 's32[1]{0}', space=sflag, size = 0x4, scoped, tag = 'scoped memory for tkge_forward.1']
  #allocation3 [shape = 'u8[512]{0}', space=smem, size = 0x200, scoped, tag = 'prefetched SMEM operand 0']
  %s0 = inlined_call_operand.vmem [shape: s32[3], index: 0, kind: input, shape index: {}]
  %s1 = inlined_call_operand.vmem [shape: f32[24,64], index: 1, kind: input, shape index: {}]
  %s2 = inlined_call_operand.vmem [shape: f32[24,3], index: 2, kind: input, shape index: {}]
  %s3 = inlined_call_operand.vmem [shape: f32[2,3,64,64], index: 3, kind: input, shape index: {}]
  %s4 = inlined_call_operand.vmem [shape: f32[2,64,256], index: 4, kind: input, shape index: {}]
  %s5 = inlined_call_operand.vmem [shape: f32[24,256], index: 5, kind: output, shape index: {}]
  %s6 = sld [smem:[#allocation0]]
  $region49: #{tkge_forward.1} parent=0
    _
  %s8 = ssub.s32 1, %s6
  %s9 = scalar_select 0, %s8, %s6
  %s10 = sshll.u32 %s0, 4
  %s11 = int_to_ptr.vmem [resolvable:$true] %s10
  %13 = dma.vmem_to_smem %s11, 16, [#allocation3], [#allocation2]
  %14 = dma.done [#allocation2], 16
  %15 = sfence
  loop: start=0, step=1, limit=5
  $region2: #{tkge_forward.1} parent=0 // loop_pre_header
    _
  $region3: #{tkge_forward.1} parent=0 // loop_header
    %s17 = sphi 0, %s21
    %p18 = scmp.ge.s32.totalorder %s17, 5
    %s27 = sphi 0, %s29
    %s30 = sphi 0, %s27
    %s31 = sphi 0, %s30
    %s47 = sphi 0, %s31
    %s53 = sphi 0, %s55
    %s56 = sphi 0, %s53
    %s57 = sphi 0, %s56
    %s73 = sphi 0, %s57
    %s81 = sphi 0, %s83
    %s84 = sphi 0, %s81
    %s85 = sphi 0, %s84
    %s101 = sphi 0, %s85
    %s109 = sphi 0, %s111
    %s112 = sphi 0, %s109
    %s113 = sphi 0, %s112
    %s129 = sphi 0, %s113
    %s135 = sphi 0, %s137
    %s138 = sphi 0, %s135
    %s139 = sphi 0, %s138
    %s155 = sphi 0, %s139
  $region4: #{tkge_forward.1} parent=0 // loop_header_branch
    %20 = sbr.rel (%p18) target = $region8
  $region5: #{tkge_forward.1} parent=0 // loop_body
    %s22 = ssub.s32 %s17, 1
    %s23 = ssub.s32 %s17, 2
    %s24 = sadd.s32 %s17, 1
    %s25 = ssub.s32 %s17, %s24
    %p26 = scmp.eq.s32.totalorder %s25, 0
    %s28 = sadd.s32 %s27, 1
    %s29 = scalar_select %p26, %s27, %s28
    %p32 = pneg %p26
    %p33 = scmp.eq.s32.totalorder %s17, 2
    %p34 = por %p32, %p33
    %p35 = scmp.ne.s32.totalorder %s27, %s30
    %p36 = scmp.eq.s32.totalorder %s17, 0
    %p37 = por %p35, %p36
    %p38 = scmp.ne.s32.totalorder %s27, %s30
    %p39 = scmp.eq.s32.totalorder %s22, 2
    %p40 = por %p38, %p39
    %p41 = scmp.ne.s32.totalorder %s30, %s31
    %p42 = scmp.eq.s32.totalorder %s22, 0
    %p43 = por %p41, %p42
    %p44 = scmp.ne.s32.totalorder %s30, %s31
    %p45 = scmp.eq.s32.totalorder %s23, 2
    %p46 = por %p44, %p45
    %p48 = scmp.ne.s32.totalorder %s31, %s47
    %p49 = scmp.eq.s32.totalorder %s23, 0
    %p50 = por %p48, %p49
    %s51 = ssub.s32 %s17, %s24
    %p52 = scmp.eq.s32.totalorder %s51, 0
    %s54 = sadd.s32 %s53, 1
    %s55 = scalar_select %p52, %s53, %s54
    %p58 = pneg %p52
    %p59 = scmp.eq.s32.totalorder %s17, 2
    %p60 = por %p58, %p59
    %p61 = scmp.ne.s32.totalorder %s53, %s56
    %p62 = scmp.eq.s32.totalorder %s17, 0
    %p63 = por %p61, %p62
    %p64 = scmp.ne.s32.totalorder %s53, %s56
    %p65 = scmp.eq.s32.totalorder %s22, 2
    %p66 = por %p64, %p65
    %p67 = scmp.ne.s32.totalorder %s56, %s57
    %p68 = scmp.eq.s32.totalorder %s22, 0
    %p69 = por %p67, %p68
    %p70 = scmp.ne.s32.totalorder %s56, %s57
    %p71 = scmp.eq.s32.totalorder %s23, 2
    %p72 = por %p70, %p71
    %p74 = scmp.ne.s32.totalorder %s57, %s73
    %p75 = scmp.eq.s32.totalorder %s23, 0
    %p76 = por %p74, %p75
    %s77 = sld [smem:[#allocation3 + %s17]]
    %s78 = sld [smem:[#allocation3 + %s24]]
    %s79 = ssub.s32 %s77, %s78
    %p80 = scmp.eq.s32.totalorder %s79, 0
    %s82 = sadd.s32 %s81, 1
    %s83 = scalar_select %p80, %s81, %s82
    %p86 = pneg %p80
    %p87 = scmp.eq.s32.totalorder %s17, 2
    %p88 = por %p86, %p87
    %p89 = scmp.ne.s32.totalorder %s81, %s84
    %p90 = scmp.eq.s32.totalorder %s17, 0
    %p91 = por %p89, %p90
    %p92 = scmp.ne.s32.totalorder %s81, %s84
    %p93 = scmp.eq.s32.totalorder %s22, 2
    %p94 = por %p92, %p93
    %p95 = scmp.ne.s32.totalorder %s84, %s85
    %p96 = scmp.eq.s32.totalorder %s22, 0
    %p97 = por %p95, %p96
    %p98 = scmp.ne.s32.totalorder %s84, %s85
    %p99 = scmp.eq.s32.totalorder %s23, 2
    %p100 = por %p98, %p99
    %p102 = scmp.ne.s32.totalorder %s85, %s101
    %p103 = scmp.eq.s32.totalorder %s23, 0
    %p104 = por %p102, %p103
    %s105 = sld [smem:[#allocation3 + %s17]]
    %s106 = sld [smem:[#allocation3 + %s24]]
    %s107 = ssub.s32 %s105, %s106
    %p108 = scmp.eq.s32.totalorder %s107, 0
    %s110 = sadd.s32 %s109, 1
    %s111 = scalar_select %p108, %s109, %s110
    %p114 = pneg %p108
    %p115 = scmp.eq.s32.totalorder %s17, 2
    %p116 = por %p114, %p115
    %p117 = scmp.ne.s32.totalorder %s109, %s112
    %p118 = scmp.eq.s32.totalorder %s17, 0
    %p119 = por %p117, %p118
    %p120 = scmp.ne.s32.totalorder %s109, %s112
    %p121 = scmp.eq.s32.totalorder %s22, 2
    %p122 = por %p120, %p121
    %p123 = scmp.ne.s32.totalorder %s112, %s113
    %p124 = scmp.eq.s32.totalorder %s22, 0
    %p125 = por %p123, %p124
    %p126 = scmp.ne.s32.totalorder %s112, %s113
    %p127 = scmp.eq.s32.totalorder %s23, 2
    %p128 = por %p126, %p127
    %p130 = scmp.ne.s32.totalorder %s113, %s129
    %p131 = scmp.eq.s32.totalorder %s23, 0
    %p132 = por %p130, %p131
    %s133 = ssub.s32 %s17, %s24
    %p134 = scmp.eq.s32.totalorder %s133, 0
    %s136 = sadd.s32 %s135, 1
    %s137 = scalar_select %p134, %s135, %s136
    %p140 = pneg %p134
    %p141 = scmp.eq.s32.totalorder %s17, 2
    %p142 = por %p140, %p141
    %p143 = scmp.ne.s32.totalorder %s135, %s138
    %p144 = scmp.eq.s32.totalorder %s17, 0
    %p145 = por %p143, %p144
    %p146 = scmp.ne.s32.totalorder %s135, %s138
    %p147 = scmp.eq.s32.totalorder %s22, 2
    %p148 = por %p146, %p147
    %p149 = scmp.ne.s32.totalorder %s138, %s139
    %p150 = scmp.eq.s32.totalorder %s22, 0
    %p151 = por %p149, %p150
    %p152 = scmp.ne.s32.totalorder %s138, %s139
    %p153 = scmp.eq.s32.totalorder %s23, 2
    %p154 = por %p152, %p153
    %p156 = scmp.ne.s32.totalorder %s139, %s155
    %p157 = scmp.eq.s32.totalorder %s23, 0
    %p158 = por %p156, %p157
    %p159 = scmp.le.s32.totalorder 1, %s17
    %p160 = scmp.lt.s32.totalorder %s17, 4
    %p161 = pnand %p159, %p160
    %p162 = pneg %p161
    // Predicated region
    $region9: #{tkge_forward.1} parent=5 // pred_check
      _
    $region10: #{tkge_forward.1} parent=5 // pred_check_branch
      %164 = sbr.rel (%p161) target = $region12
    $region11: #{tkge_forward.1} parent=5 // pred_region
      %s165 = ssub.s32 %s17, 1
    $region12: #{tkge_forward.1} parent=5 // pred_fallthru
      _
    %p166 = scmp.lt.s32.totalorder %s17, 3
    // Predicated region
    $region13: #{tkge_forward.1} parent=5 // pred_check
      %p167 = pneg %p166
    $region14: #{tkge_forward.1} parent=5 // pred_check_branch
      %169 = sbr.rel (%p167) target = $region16
    $region15: #{tkge_forward.1} parent=5 // pred_region
      // Predicated region
      $region17: #{tkge_forward.1} parent=15 // pred_check
        %p170 = pneg %p37
      $region18: #{tkge_forward.1} parent=15 // pred_check_branch
        %172 = sbr.rel (%p170) target = $region20
      $region19: #{tkge_forward.1} parent=15 // pred_region
        %p173 = scmp.lt.s32.totalorder %s17, 2
        %s174 = scalar_select %p173, %s17, 2
        %s175 = smul.addr %s174, 8
        %s176 = scalar_lea.vmem %s1, %s175
      $region20: #{tkge_forward.1} parent=15 // pred_fallthru
        _
      // Predicated region
      $region21: #{tkge_forward.1} parent=15 // pred_check
        %p177 = pneg %p63
      $region22: #{tkge_forward.1} parent=15 // pred_check_branch
        %179 = sbr.rel (%p177) target = $region24
      $region23: #{tkge_forward.1} parent=15 // pred_region
        %p180 = scmp.lt.s32.totalorder %s17, 2
        %s181 = scalar_select %p180, %s17, 2
        %s182 = smul.addr %s181, 8
        %s183 = scalar_lea.vmem %s2, %s182
      $region24: #{tkge_forward.1} parent=15 // pred_fallthru
        _
      // Predicated region
      $region25: #{tkge_forward.1} parent=15 // pred_check
        %p184 = pneg %p91
      $region26: #{tkge_forward.1} parent=15 // pred_check_branch
        %186 = sbr.rel (%p184) target = $region28
      $region27: #{tkge_forward.1} parent=15 // pred_region
        %s187 = sld [smem:[#allocation3 + %s17]]
        %p188 = scmp.lt.s32.totalorder %s187, 1
        %s189 = scalar_select %p188, %s187, 1
        %s190 = smul.addr %s189, 24
        %s191 = smul.addr %s190, 8
        %s192 = scalar_lea.vmem %s3, %s191
        %s193 = sld [smem:[#allocation3 + %s17]]
      $region28: #{tkge_forward.1} parent=15 // pred_fallthru
        _
      // Predicated region
      $region29: #{tkge_forward.1} parent=15 // pred_check
        %p194 = pneg %p119
      $region30: #{tkge_forward.1} parent=15 // pred_check_branch
        %196 = sbr.rel (%p194) target = $region32
      $region31: #{tkge_forward.1} parent=15 // pred_region
        %s197 = sld [smem:[#allocation3 + %s17]]
        %p198 = scmp.lt.s32.totalorder %s197, 1
        %s199 = scalar_select %p198, %s197, 1
        %s200 = smul.addr %s199, 16
        %s201 = smul.addr %s200, 8
        %s202 = scalar_lea.vmem %s4, %s201
        %s203 = sld [smem:[#allocation3 + %s17]]
      $region32: #{tkge_forward.1} parent=15 // pred_fallthru
        _
    $region16: #{tkge_forward.1} parent=5 // pred_fallthru
      _
    %p204 = scmp.le.s32.totalorder 1, %s17
    %p205 = scmp.lt.s32.totalorder %s17, 4
    %p206 = pnand %p204, %p205
    %p207 = pneg %p206
    // Predicated region
    $region33: #{tkge_forward.1} parent=5 // pred_check
      _
    $region34: #{tkge_forward.1} parent=5 // pred_check_branch
      %209 = sbr.rel (%p206) target = $region36
    $region35: #{tkge_forward.1} parent=5 // pred_region
      %s210 = ssub.s32 %s17, 1
      %p211 = scmp.lt.s32.totalorder %s22, 2
      %s212 = scalar_select %p211, %s22, 2
      %s213 = smul.addr %s212, 8
      %s214 = scalar_lea.vmem %s1, %s213
      %p215 = pneg %p43
      %p216 = pneg %p40
      %p217 = scmp.lt.s32.totalorder %s22, 2
      %s218 = scalar_select %p217, %s22, 2
      %s219 = smul.addr %s218, 8
      %s220 = scalar_lea.vmem %s2, %s219
      %p221 = pneg %p69
      %p222 = pneg %p66
      %s223 = sld [smem:[#allocation3 + %s22]]
      %p224 = scmp.lt.s32.totalorder %s223, 1
      %s225 = scalar_select %p224, %s223, 1
      %s226 = smul.addr %s225, 24
      %s227 = smul.addr %s226, 8
      %s228 = scalar_lea.vmem %s3, %s227
      %p229 = pneg %p97
      %p230 = pneg %p94
      %s231 = sld [smem:[#allocation3 + %s22]]
      %p232 = scmp.lt.s32.totalorder %s231, 1
      %s233 = scalar_select %p232, %s231, 1
      %s234 = smul.addr %s233, 16
      %s235 = smul.addr %s234, 8
      %s236 = scalar_lea.vmem %s4, %s235
      %p237 = pneg %p125
      %p238 = pneg %p122
      %p239 = pneg %p151
      %p240 = pneg %p148
      %p241 = scmp.lt.s32.totalorder %s22, 2
      %s242 = scalar_select %p241, %s22, 2
      %s243 = smul.addr %s242, 2
      %s244 = smul.addr %s243, 8
      %s245 = scalar_lea.vmem %s5, %s244
      %p246 = scmp.lt.s32.totalorder %s22, 2
      %s247 = scalar_select %p246, %s22, 2
      %s248 = smul.addr %s247, 8
      %s249 = scalar_lea.vmem %s1, %s248
      %p250 = scmp.lt.s32.totalorder %s22, 2
      %s251 = scalar_select %p250, %s22, 2
      %s252 = smul.addr %s251, 8
      %s253 = scalar_lea.vmem %s2, %s252
      %s254 = sld [smem:[#allocation3 + %s22]]
      %p255 = scmp.lt.s32.totalorder %s254, 1
      %s256 = scalar_select %p255, %s254, 1
      %s257 = smul.addr %s256, 24
      %s258 = smul.addr %s257, 8
      %s259 = scalar_lea.vmem %s3, %s258
      %s260 = sld [smem:[#allocation3 + %s22]]
      %s261 = sld [smem:[#allocation3 + %s22]]
      %p262 = scmp.lt.s32.totalorder %s261, 1
      %s263 = scalar_select %p262, %s261, 1
      %s264 = smul.addr %s263, 16
      %s265 = smul.addr %s264, 8
      %s266 = scalar_lea.vmem %s4, %s265
      %s267 = sld [smem:[#allocation3 + %s22]]
      %p268 = scmp.lt.s32.totalorder %s22, 2
      %s269 = scalar_select %p268, %s22, 2
      %s270 = smul.addr %s269, 2
      %s271 = smul.addr %s270, 8
      %s272 = scalar_lea.vmem %s5, %s271
      %v274 = vld [vmem:[%s249] sm:$0xff]
      %v275 = vpack.c.bf16 %v274, %v274
      %v276 = vld [vmem:[%s253] sm:$0xff]
      %v277 = vld [vmem:[%s259] sm:$0xff]
      %v278 = vld [vmem:[%s259 + $0x8] sm:$0xff]
      %v279 = vld [vmem:[%s259 + $0x10] sm:$0xff]
      %v280 = vld [vmem:[%s259 + $0x18] sm:$0xff]
      %v281 = vld [vmem:[%s259 + $0x20] sm:$0xff]
      %v282 = vld [vmem:[%s259 + $0x28] sm:$0xff]
      %v283 = vld [vmem:[%s259 + $0x30] sm:$0xff]
      %v284 = vld [vmem:[%s259 + $0x38] sm:$0xff]
      %v285 = vpack.c.bf16 %v278, %v277
      %v286 = vpack.c.bf16 %v280, %v279
      %v287 = vpack.c.bf16 %v282, %v281
      %v288 = vpack.c.bf16 %v284, %v283
      %vm289 = vcmask 523264
      %v291 = vsel %vm289, %v275, 0
      %293 = vmatprep.subr.bf16.mxu0 0
      %294 = vmatpush1.bf16.msra.mxu0 0
      %295 = vmatprep.subr.bf16.mxu0 0
      %296 = vmatpush1.bf16.msra.mxu0 0
      %297 = vmatprep.subr.bf16.mxu0 0
      %298 = vmatpush1.bf16.msra.mxu0 0
      %299 = vmatprep.subr.bf16.mxu0 0
      %300 = vmatpush1.bf16.msra.mxu0 0
      %301 = vmatprep.subr.bf16.mxu0 0
      %302 = vmatpush1.bf16.msra.mxu0 %v288
      %303 = vmatprep.subr.bf16.mxu0 0
      %304 = vmatpush1.bf16.msra.mxu0 %v287
      %305 = vmatprep.subr.bf16.mxu0 0
      %306 = vmatpush1.bf16.msra.mxu0 %v286
      %307 = vmatprep.subr.bf16.mxu0 0
      %308 = vmatpush1.bf16.msra.mxu0 %v285
      %309 = vmatprep.subr.bf16.mxu0 0
      %310 = vmatpush2.bf16.msra.mxu0 0
      %311 = vmatprep.subr.bf16.mxu0 0
      %312 = vmatpush2.bf16.msra.mxu0 0
      %313 = vmatprep.subr.bf16.mxu0 0
      %314 = vmatpush2.bf16.msra.mxu0 0
      %315 = vmatprep.subr.bf16.mxu0 0
      %316 = vmatpush2.bf16.msra.mxu0 0
      %317 = vmatprep.subr.bf16.mxu0 0
      %318 = vmatpush2.bf16.msra.mxu0 0
      %319 = vmatprep.subr.bf16.mxu0 0
      %320 = vmatpush2.bf16.msra.mxu0 0
      %321 = vmatprep.subr.bf16.mxu0 0
      %322 = vmatpush2.bf16.msra.mxu0 0
      %323 = vmatprep.subr.bf16.mxu0 0
      %324 = vmatpush2.bf16.msra.mxu0 0
      %325 = vmatprep.mubr.bf16.mxu0 0
      %326 = vmatmul.mubr.bf16.gmra.mxu0 %v291
      %v327 = vpop.f32.mrf.mxu0
      %v328 = vadd.f32 0.0, %v327
      %v329 = vpop.f32.mrf.mxu0
      %v330 = vpop.f32.mrf.mxu0
      %v331 = vpop.f32.mrf.mxu0
      %332 = vdwg.mxu0
      %334 = vset.pattern.permute.xlu0 0
      %335 = vperm.xlu0 %334, %v276
      %v336 = vpop.permute.xlu0 %335
      %v338 = vmul.f32 %v336, %v328
      %v339 = vadd.f32 %v338, 0.0
      %s340 = scalar_lea.vmem %s259, 64
      %v341 = vld [vmem:[%s340] sm:$0xff]
      %v342 = vld [vmem:[%s340 + $0x8] sm:$0xff]
      %v343 = vld [vmem:[%s340 + $0x10] sm:$0xff]
      %v344 = vld [vmem:[%s340 + $0x18] sm:$0xff]
      %v345 = vld [vmem:[%s340 + $0x20] sm:$0xff]
      %v346 = vld [vmem:[%s340 + $0x28] sm:$0xff]
      %v347 = vld [vmem:[%s340 + $0x30] sm:$0xff]
      %v348 = vld [vmem:[%s340 + $0x38] sm:$0xff]
      %v349 = vpack.c.bf16 %v342, %v341
      %v350 = vpack.c.bf16 %v344, %v343
      %v351 = vpack.c.bf16 %v346, %v345
      %v352 = vpack.c.bf16 %v348, %v347
      %353 = vmatprep.subr.bf16.mxu0 0
      %354 = vmatpush1.bf16.msra.mxu0 0
      %355 = vmatprep.subr.bf16.mxu0 0
      %356 = vmatpush1.bf16.msra.mxu0 0
      %357 = vmatprep.subr.bf16.mxu0 0
      %358 = vmatpush1.bf16.msra.mxu0 0
      %359 = vmatprep.subr.bf16.mxu0 0
      %360 = vmatpush1.bf16.msra.mxu0 0
      %361 = vmatprep.subr.bf16.mxu0 0
      %362 = vmatpush1.bf16.msra.mxu0 %v352
      %363 = vmatprep.subr.bf16.mxu0 0
      %364 = vmatpush1.bf16.msra.mxu0 %v351
      %365 = vmatprep.subr.bf16.mxu0 0
      %366 = vmatpush1.bf16.msra.mxu0 %v350
      %367 = vmatprep.subr.bf16.mxu0 0
      %368 = vmatpush1.bf16.msra.mxu0 %v349
      %369 = vmatprep.subr.bf16.mxu0 0
      %370 = vmatpush2.bf16.msra.mxu0 0
      %371 = vmatprep.subr.bf16.mxu0 0
      %372 = vmatpush2.bf16.msra.mxu0 0
      %373 = vmatprep.subr.bf16.mxu0 0
      %374 = vmatpush2.bf16.msra.mxu0 0
      %375 = vmatprep.subr.bf16.mxu0 0
      %376 = vmatpush2.bf16.msra.mxu0 0
      %377 = vmatprep.subr.bf16.mxu0 0
      %378 = vmatpush2.bf16.msra.mxu0 0
      %379 = vmatprep.subr.bf16.mxu0 0
      %380 = vmatpush2.bf16.msra.mxu0 0
      %381 = vmatprep.subr.bf16.mxu0 0
      %382 = vmatpush2.bf16.msra.mxu0 0
      %383 = vmatprep.subr.bf16.mxu0 0
      %384 = vmatpush2.bf16.msra.mxu0 0
      %385 = vmatprep.mubr.bf16.mxu0 0
      %386 = vmatmul.mubr.bf16.gmra.mxu0 %v291
      %v387 = vpop.f32.mrf.mxu0
      %v388 = vadd.f32 0.0, %v387
      %v389 = vpop.f32.mrf.mxu0
      %v390 = vpop.f32.mrf.mxu0
      %v391 = vpop.f32.mrf.mxu0
      %392 = vdwg.mxu0
      %393 = vset.pattern.permute.xlu0 1
      %394 = vperm.xlu0 %393, %v276
      %v395 = vpop.permute.xlu0 %394
      %v397 = vmul.f32 %v395, %v388
      %v398 = vadd.f32 %v339, %v397
      %s399 = scalar_lea.vmem %s259, 128
      %v400 = vld [vmem:[%s399] sm:$0xff]
      %v401 = vld [vmem:[%s399 + $0x8] sm:$0xff]
      %v402 = vld [vmem:[%s399 + $0x10] sm:$0xff]
      %v403 = vld [vmem:[%s399 + $0x18] sm:$0xff]
      %v404 = vld [vmem:[%s399 + $0x20] sm:$0xff]
      %v405 = vld [vmem:[%s399 + $0x28] sm:$0xff]
      %v406 = vld [vmem:[%s399 + $0x30] sm:$0xff]
      %v407 = vld [vmem:[%s399 + $0x38] sm:$0xff]
      %v408 = vpack.c.bf16 %v401, %v400
      %v409 = vpack.c.bf16 %v403, %v402
      %v410 = vpack.c.bf16 %v405, %v404
      %v411 = vpack.c.bf16 %v407, %v406
      %412 = vmatprep.subr.bf16.mxu0 0
      %413 = vmatpush1.bf16.msra.mxu0 0
      %414 = vmatprep.subr.bf16.mxu0 0
      %415 = vmatpush1.bf16.msra.mxu0 0
      %416 = vmatprep.subr.bf16.mxu0 0
      %417 = vmatpush1.bf16.msra.mxu0 0
      %418 = vmatprep.subr.bf16.mxu0 0
      %419 = vmatpush1.bf16.msra.mxu0 0
      %420 = vmatprep.subr.bf16.mxu0 0
      %421 = vmatpush1.bf16.msra.mxu0 %v411
      %422 = vmatprep.subr.bf16.mxu0 0
      %423 = vmatpush1.bf16.msra.mxu0 %v410
      %424 = vmatprep.subr.bf16.mxu0 0
      %425 = vmatpush1.bf16.msra.mxu0 %v409
      %426 = vmatprep.subr.bf16.mxu0 0
      %427 = vmatpush1.bf16.msra.mxu0 %v408
      %428 = vmatprep.subr.bf16.mxu0 0
      %429 = vmatpush2.bf16.msra.mxu0 0
      %430 = vmatprep.subr.bf16.mxu0 0
      %431 = vmatpush2.bf16.msra.mxu0 0
      %432 = vmatprep.subr.bf16.mxu0 0
      %433 = vmatpush2.bf16.msra.mxu0 0
      %434 = vmatprep.subr.bf16.mxu0 0
      %435 = vmatpush2.bf16.msra.mxu0 0
      %436 = vmatprep.subr.bf16.mxu0 0
      %437 = vmatpush2.bf16.msra.mxu0 0
      %438 = vmatprep.subr.bf16.mxu0 0
      %439 = vmatpush2.bf16.msra.mxu0 0
      %440 = vmatprep.subr.bf16.mxu0 0
      %441 = vmatpush2.bf16.msra.mxu0 0
      %442 = vmatprep.subr.bf16.mxu0 0
      %443 = vmatpush2.bf16.msra.mxu0 0
      %444 = vmatprep.mubr.bf16.mxu0 0
      %445 = vmatmul.mubr.bf16.gmra.mxu0 %v291
      %v446 = vpop.f32.mrf.mxu0
      %v447 = vadd.f32 0.0, %v446
      %v448 = vpop.f32.mrf.mxu0
      %v449 = vpop.f32.mrf.mxu0
      %v450 = vpop.f32.mrf.mxu0
      %451 = vdwg.mxu0
      %452 = vset.pattern.permute.xlu0 2
      %453 = vperm.xlu0 %452, %v276
      %v454 = vpop.permute.xlu0 %453
      %v456 = vmul.f32 %v454, %v447
      %v457 = vadd.f32 %v398, %v456
      %v458 = vld [vmem:[%s266] sm:$0xff]
      %v459 = vld [vmem:[%s266 + $0x8] sm:$0xff]
      %v460 = vld [vmem:[%s266 + $0x10] sm:$0xff]
      %v461 = vld [vmem:[%s266 + $0x18] sm:$0xff]
      %v462 = vld [vmem:[%s266 + $0x20] sm:$0xff]
      %v463 = vld [vmem:[%s266 + $0x28] sm:$0xff]
      %v464 = vld [vmem:[%s266 + $0x30] sm:$0xff]
      %v465 = vld [vmem:[%s266 + $0x38] sm:$0xff]
      %v466 = vld [vmem:[%s266 + $0x40] sm:$0xff]
      %v467 = vld [vmem:[%s266 + $0x48] sm:$0xff]
      %v468 = vld [vmem:[%s266 + $0x50] sm:$0xff]
      %v469 = vld [vmem:[%s266 + $0x58] sm:$0xff]
      %v470 = vld [vmem:[%s266 + $0x60] sm:$0xff]
      %v471 = vld [vmem:[%s266 + $0x68] sm:$0xff]
      %v472 = vld [vmem:[%s266 + $0x70] sm:$0xff]
      %v473 = vld [vmem:[%s266 + $0x78] sm:$0xff]
      %v474 = vpack.c.bf16 %v460, %v458
      %v475 = vpack.c.bf16 %v461, %v459
      %v476 = vpack.c.bf16 %v464, %v462
      %v477 = vpack.c.bf16 %v465, %v463
      %v478 = vpack.c.bf16 %v468, %v466
      %v479 = vpack.c.bf16 %v469, %v467
      %v480 = vpack.c.bf16 %v472, %v470
      %v481 = vpack.c.bf16 %v473, %v471
      %v482 = vpack.c.bf16 %v457, %v457
      %v484 = vsel %vm289, %v482, 0
      %486 = vmatprep.subr.bf16.mxu0 0
      %487 = vmatpush1.bf16.msra.mxu0 0
      %488 = vmatprep.subr.bf16.mxu0 0
      %489 = vmatpush1.bf16.msra.mxu0 0
      %490 = vmatprep.subr.bf16.mxu0 0
      %491 = vmatpush1.bf16.msra.mxu0 0
      %492 = vmatprep.subr.bf16.mxu0 0
      %493 = vmatpush1.bf16.msra.mxu0 0
      %494 = vmatprep.subr.bf16.mxu0 %v481
      %495 = vmatpush1.bf16.msra.mxu0 %v480
      %496 = vmatprep.subr.bf16.mxu0 %v479
      %497 = vmatpush1.bf16.msra.mxu0 %v478
      %498 = vmatprep.subr.bf16.mxu0 %v477
      %499 = vmatpush1.bf16.msra.mxu0 %v476
      %500 = vmatprep.subr.bf16.mxu0 %v475
      %501 = vmatpush1.bf16.msra.mxu0 %v474
      %502 = vmatprep.subr.bf16.mxu0 0
      %503 = vmatpush2.bf16.msra.mxu0 0
      %504 = vmatprep.subr.bf16.mxu0 0
      %505 = vmatpush2.bf16.msra.mxu0 0
      %506 = vmatprep.subr.bf16.mxu0 0
      %507 = vmatpush2.bf16.msra.mxu0 0
      %508 = vmatprep.subr.bf16.mxu0 0
      %509 = vmatpush2.bf16.msra.mxu0 0
      %510 = vmatprep.subr.bf16.mxu0 0
      %511 = vmatpush2.bf16.msra.mxu0 0
      %512 = vmatprep.subr.bf16.mxu0 0
      %513 = vmatpush2.bf16.msra.mxu0 0
      %514 = vmatprep.subr.bf16.mxu0 0
      %515 = vmatpush2.bf16.msra.mxu0 0
      %516 = vmatprep.subr.bf16.mxu0 0
      %517 = vmatpush2.bf16.msra.mxu0 0
      %518 = vmatprep.mubr.bf16.mxu0 0
      %519 = vmatmul.mubr.bf16.gmra.mxu0 %v484
      %v520 = vpop.f32.mrf.mxu0
      %v521 = vadd.f32 0.0, %v520
      %v522 = vpop.f32.mrf.mxu0
      %v523 = vadd.f32 0.0, %v522
      %v524 = vpop.f32.mrf.mxu0
      %v525 = vpop.f32.mrf.mxu0
      %526 = vdwg.mxu0
      %527 = vst [vmem:[%s272] sm:$0xff] %v521
      %528 = vst [vmem:[%s272 + $0x8] sm:$0xff] %v523
      %p529 = scmp.lt.s32.totalorder %s22, 2
      %s530 = scalar_select %p529, %s22, 2
      %s531 = smul.addr %s530, 2
      %s532 = smul.addr %s531, 8
      %s533 = scalar_lea.vmem %s5, %s532
      // Predicated region
      $region37: #{tkge_forward.1} parent=35 // pred_check
        %p534 = pneg %p148
      $region38: #{tkge_forward.1} parent=35 // pred_check_branch
        %536 = sbr.rel (%p534) target = $region40
      $region39: #{tkge_forward.1} parent=35 // pred_region
        _
      $region40: #{tkge_forward.1} parent=35 // pred_fallthru
        _
    $region36: #{tkge_forward.1} parent=5 // pred_fallthru
      _
    %p537 = scmp.le.s32.totalorder 2, %s17
    // Predicated region
    $region41: #{tkge_forward.1} parent=5 // pred_check
      %p538 = pneg %p537
    $region42: #{tkge_forward.1} parent=5 // pred_check_branch
      %540 = sbr.rel (%p538) target = $region44
    $region43: #{tkge_forward.1} parent=5 // pred_region
      %s541 = ssub.s32 %s17, 2
      // Predicated region
      $region45: #{tkge_forward.1} parent=43 // pred_check
        %p542 = pneg %p154
      $region46: #{tkge_forward.1} parent=43 // pred_check_branch
        %544 = sbr.rel (%p542) target = $region48
      $region47: #{tkge_forward.1} parent=43 // pred_region
        %p545 = scmp.lt.s32.totalorder %s23, 2
        %s546 = scalar_select %p545, %s23, 2
        %s547 = smul.addr %s546, 2
        %s548 = smul.addr %s547, 8
        %s549 = scalar_lea.vmem %s5, %s548
      $region48: #{tkge_forward.1} parent=43 // pred_fallthru
        _
    $region44: #{tkge_forward.1} parent=5 // pred_fallthru
      _
  $region6: #{tkge_forward.1} parent=0 // loop_footer
    %s21 = sadd.s32 1, %s17
  $region7: #{tkge_forward.1} parent=0 // loop_footer_branch
    %16 = sbr.rel target = $region3
  $region8: #{tkge_forward.1} parent=0 // loop_exit
    _

</llo_original>
